<compile_context>
chip_gen: v7x
topology: tpu7x:2x2x1
jax: 0.10.0
libtpu: 0.0.40
codegen_flags: <defaults>
</compile_context>

<pallas_src>
from typing import Any, Dict

import jax
import jax.numpy as jnp
from jax import lax
from jax.experimental import pallas as pl
from jax.experimental.pallas import tpu as pltpu


# ----------------------------------------------------------------------------
# Pallas kernel: per-pixel MLP in channels-on-sublane / pixels-on-lane layout
# ----------------------------------------------------------------------------
def _pixel_mlp_kernel(x_ref, w1t_ref, b1_ref, w2t_ref, b2_ref, o_ref):
    # x_ref  : (B_TILE, C_in, TM)   -- B_TILE images, one pixel tile (lanes = pixels)
    # w1t_ref: (HID, C_in)  bf16    b1_ref: (HID, 1)  f32
    # w2t_ref: (C_out, HID) bf16    b2_ref: (C_out, 1) f32
    # o_ref  : (B_TILE, C_out, TM)
    b_tile = x_ref.shape[0]                     # static
    w1t = w1t_ref[...]
    b1 = b1_ref[...]
    w2t = w2t_ref[...]
    b2 = b2_ref[...]

    def body(b, carry):
        x = x_ref[b]                                                     # (C_in, TM)
        h = jnp.dot(w1t, x, preferred_element_type=jnp.float32)          # MXU, f32 acc
        h = jnp.maximum(h + b1, 0.0)                                     # f32, VMEM-local
        y = jnp.dot(w2t, h.astype(w2t.dtype),
                    preferred_element_type=jnp.float32)                  # MXU, f32 acc
        o_ref[b] = (y + b2).astype(o_ref.dtype)                          # lane-dense store
        return carry

    lax.fori_loop(0, b_tile, body, 0, unroll=True)


def _choose_tiles(n, hw, c_in, c_out, hid, io_bytes, vmem_budget_bytes):
    """Pick (b_tile, tm). tm is lane-dense (multiple of 128, or full dim if hw<128)
    and the per-step working set stays within vmem_budget_bytes."""
    # Per pixel per image: double-buffered in/out tiles (io dtype) + f32 hidden
    # activation + f32 output accumulator.
    per_px = 2 * (c_in + c_out) * io_bytes + (hid + c_out) * 4
    hw_pad = ((hw + 127) // 128) * 128

    if hw < 128:
        tm = hw                                    # full-extent last dim is legal
    else:
        tm = (vmem_budget_bytes // per_px) // 128 * 128
        tm = max(128, min(tm, hw_pad))             # always a multiple of 128

    # If one image's pixels fit in a single tile, batch images per grid step.
    b_tile = 1
    if tm >= hw:
        b_tile = max(1, vmem_budget_bytes // (per_px * max(tm, 1)))
    b_tile = int(min(b_tile, n, 8))                # cap in-kernel unroll depth
    return b_tile, int(tm)


def pixel_mlp_nchw(x, w1t, b1, w2t, b2, *,
                   compute_dtype=jnp.bfloat16,
                   vmem_budget_bytes=20 * 1024 * 1024):
    """Per-pixel MLP on an NCHW tensor, returning NCHW (in compute_dtype).
    No transposes: NCHW -> (N, C, H*W) is a pure reshape."""
    n, c_in, h, w = x.shape
    hw = h * w
    hid = w1t.shape[0]
    c_out = w2t.shape[0]
    io_bytes = jnp.dtype(compute_dtype).itemsize

    # bf16 at the pallas_call boundary: halves HBM bytes (kernel is bandwidth bound).
    x3 = x.reshape(n, c_in, hw).astype(compute_dtype)
    w1t_c = w1t.astype(compute_dtype)
    w2t_c = w2t.astype(compute_dtype)
    b1_f = b1.astype(jnp.float32)     # biases stay f32: added on the f32 accumulator
    b2_f = b2.astype(jnp.float32)

    b_tile, tm = _choose_tiles(n, hw, c_in, c_out, hid, io_bytes, vmem_budget_bytes)

    weights_bytes = 2 * ((hid * c_in + hid) + (c_out * hid + c_out)) * 4
    per_px = 2 * (c_in + c_out) * io_bytes + (hid + c_out) * 4
    step_bytes = b_tile * tm * per_px + weights_bytes
    vmem_limit = int(min(48 * 1024 * 1024,
                         max(16 * 1024 * 1024, 2 * step_bytes)))

    out3 = pl.pallas_call(
        _pixel_mlp_kernel,
        out_shape=jax.ShapeDtypeStruct((n, c_out, hw), compute_dtype),
        grid_spec=pltpu.PrefetchScalarGridSpec(
            num_scalar_prefetch=0,
            grid=(pl.cdiv(n, b_tile), pl.cdiv(hw, tm)),
            in_specs=[
                pl.BlockSpec((b_tile, c_in, tm), lambda b, m: (b, 0, m)),
                pl.BlockSpec(w1t_c.shape, lambda b, m: (0, 0)),   # weights stay resident
                pl.BlockSpec(b1_f.shape, lambda b, m: (0, 0)),
                pl.BlockSpec(w2t_c.shape, lambda b, m: (0, 0)),
                pl.BlockSpec(b2_f.shape, lambda b, m: (0, 0)),
            ],
            out_specs=pl.BlockSpec((b_tile, c_out, tm), lambda b, m: (b, 0, m)),
        ),
        compiler_params=pltpu.CompilerParams(
            dimension_semantics=("parallel", "parallel"),
            vmem_limit_bytes=vmem_limit,
        ),
    )(x3, w1t_c, b1_f, w2t_c, b2_f)

    return out3.reshape(n, c_out, h, w)   # (N, C_out, H*W) -> NCHW: pure reshape


# ----------------------------------------------------------------------------
# Synthetic inner model (the thing `_OnnxExportAdaptor` wraps)
# ----------------------------------------------------------------------------
class SyntheticModel:
    """Tiny model: per-pixel MLP over channels (two 1x1 convs + ReLU).

    Weights stored pre-transposed for the [C, M] (channels-on-sublane) layout:
      w1t: (HID, C_in), b1: (HID, 1), w2t: (C_out, HID), b2: (C_out, 1).
    """

    def __init__(self, c_in: int, hidden: int, c_out: int, key):
        k1, k2, k3, k4 = jax.random.split(key, 4)
        self.w1t = jax.random.normal(k1, (hidden, c_in), jnp.float32) * 0.1
        self.b1 = jax.random.normal(k2, (hidden, 1), jnp.float32) * 0.01
        self.w2t = jax.random.normal(k3, (c_out, hidden), jnp.float32) * 0.1
        self.b2 = jax.random.normal(k4, (c_out, 1), jnp.float32) * 0.01

    def forward(self, named_inputs: Dict[str, Any], stage: str,
                return_inputs: bool = False) -> Dict[str, Any]:
        x = named_inputs["x"]  # NCHW, fed directly to the kernel (no transpose)
        y = pixel_mlp_nchw(x, self.w1t, self.b1, self.w2t, self.b2)
        named_outputs = {"features": y}
        if return_inputs:
            named_outputs.update(named_inputs)
        return named_outputs


# ----------------------------------------------------------------------------
# _OnnxExportAdaptor equivalent
# ----------------------------------------------------------------------------
class OnnxExportAdaptor:
    """JAX equivalent of torchbricks' `_OnnxExportAdaptor`: forwards the
    named-inputs dict through the wrapped model for a fixed stage with
    return_inputs=False and returns the named-outputs dict."""
    # TODO(synk): torch.onnx export machinery / nn.Module registration is host-side
    # glue with no kernel equivalent; only the forward pass is implemented.

    def __init__(self, model: SyntheticModel, stage: str) -> None:
        self.model = model
        self.stage = stage

    def __call__(self, named_inputs: Dict[str, Any]) -> Dict[str, Any]:
        named_outputs = self.model.forward(
            named_inputs=named_inputs, stage=self.stage, return_inputs=False
        )
        return named_outputs


if __name__ == "__main__":
    key = jax.random.PRNGKey(0)
    k_model, k_x = jax.random.split(key)

    N, C_IN, H, W = 2, 4, 16, 16
    HIDDEN, C_OUT = 32, 8

    model = SyntheticModel(C_IN, HIDDEN, C_OUT, k_model)
    adaptor = OnnxExportAdaptor(model, stage="export")

    x = jax.random.normal(k_x, (N, C_IN, H, W), jnp.float32)
    named_inputs = {"x": x}

    named_outputs = adaptor(named_inputs)
    y = jax.block_until_ready(named_outputs["features"])

    # Reference in plain f32 JAX (same math, no Pallas), same layout.
    x3 = x.reshape(N, C_IN, H * W)
    h_ref = jnp.maximum(
        jnp.einsum("hc,ncm->nhm", model.w1t, x3) + model.b1[None], 0.0
    )
    ref = jnp.einsum("oh,nhm->nom", model.w2t, h_ref) + model.b2[None]
    ref = ref.reshape(N, C_OUT, H, W)

    assert y.shape == (N, C_OUT, H, W)
    # Tolerance loosened for bf16 activations/weights (f32 accumulation inside).
    assert jnp.allclose(y.astype(jnp.float32), ref, atol=3e-2, rtol=3e-2)

    print("KERNEL_OK")
</pallas_src>

<mosaic_0001>
module attributes {stable_mosaic.version = 11 : i64} {
  func.func @_pixel_mlp_kernel(%arg0: i32, %arg1: i32, %arg2: memref<2x4x256xbf16, #tpu.memory_space<vmem>>, %arg3: memref<32x4xbf16, #tpu.memory_space<vmem>>, %arg4: memref<32x1xf32, #tpu.memory_space<vmem>>, %arg5: memref<8x32xbf16, #tpu.memory_space<vmem>>, %arg6: memref<8x1xf32, #tpu.memory_space<vmem>>, %arg7: memref<2x8x256xbf16, #tpu.memory_space<vmem>>) attributes {dimension_semantics = [#tpu.dimension_semantics<parallel>, #tpu.dimension_semantics<parallel>], iteration_bounds = array<i64: 1, 1>, scalar_prefetch = 0 : i64, scratch_operands = 0 : i64, tpu.core_type = #tpu.core_type<tc>, window_params = [{transform_indices = @transform_0, window_bounds = array<i64: 2, 4, 256>}, {pipeline_mode = #tpu.pipeline_mode<synchronous>, transform_indices = @transform_1, window_bounds = array<i64: 32, 4>}, {pipeline_mode = #tpu.pipeline_mode<synchronous>, transform_indices = @transform_2, window_bounds = array<i64: 32, 1>}, {pipeline_mode = #tpu.pipeline_mode<synchronous>, transform_indices = @transform_3, window_bounds = array<i64: 8, 32>}, {pipeline_mode = #tpu.pipeline_mode<synchronous>, transform_indices = @transform_4, window_bounds = array<i64: 8, 1>}, {transform_indices = @transform_5, window_bounds = array<i64: 2, 8, 256>}]} {
    %c0 = arith.constant 0 : index
    %c0_0 = arith.constant 0 : index
    %0 = vector.load %arg3[%c0, %c0_0] : memref<32x4xbf16, #tpu.memory_space<vmem>>, vector<32x4xbf16>
    %c0_1 = arith.constant 0 : index
    %c0_2 = arith.constant 0 : index
    %1 = vector.load %arg4[%c0_1, %c0_2] : memref<32x1xf32, #tpu.memory_space<vmem>>, vector<32x1xf32>
    %c0_3 = arith.constant 0 : index
    %c0_4 = arith.constant 0 : index
    %2 = vector.load %arg5[%c0_3, %c0_4] : memref<8x32xbf16, #tpu.memory_space<vmem>>, vector<8x32xbf16>
    %c0_5 = arith.constant 0 : index
    %c0_6 = arith.constant 0 : index
    %3 = vector.load %arg6[%c0_5, %c0_6] : memref<8x1xf32, #tpu.memory_space<vmem>>, vector<8x1xf32>
    %c0_i32 = arith.constant 0 : i32
    %4 = arith.index_cast %c0_i32 : i32 to index
    %c0_7 = arith.constant 0 : index
    %c0_8 = arith.constant 0 : index
    %5 = vector.load %arg2[%4, %c0_7, %c0_8] : memref<2x4x256xbf16, #tpu.memory_space<vmem>>, vector<1x4x256xbf16>
    %6 = vector.shape_cast %5 : vector<1x4x256xbf16> to vector<4x256xbf16>
    %cst = arith.constant dense<0.000000e+00> : vector<32x256xf32>
    %7 = tpu.matmul %0, %6, %cst {dimension_numbers = #tpu.dot_dimension_numbers<[1], [0], [0], [1], [0, 0, 1, 1], [], []>} : vector<32x4xbf16>, vector<4x256xbf16>, vector<32x256xf32> -> vector<32x256xf32>
    %8 = vector.broadcast %1 : vector<32x1xf32> to vector<32x256xf32>
    %9 = arith.addf %7, %8 : vector<32x256xf32>
    %cst_9 = arith.constant 0.000000e+00 : f32
    %10 = vector.broadcast %cst_9 : f32 to vector<32x256xf32>
    %11 = arith.maximumf %9, %10 : vector<32x256xf32>
    %12 = arith.truncf %11 : vector<32x256xf32> to vector<32x256xbf16>
    %cst_10 = arith.constant dense<0.000000e+00> : vector<8x256xf32>
    %13 = tpu.matmul %2, %12, %cst_10 {dimension_numbers = #tpu.dot_dimension_numbers<[1], [0], [0], [1], [0, 0, 1, 1], [], []>} : vector<8x32xbf16>, vector<32x256xbf16>, vector<8x256xf32> -> vector<8x256xf32>
    %14 = vector.broadcast %3 : vector<8x1xf32> to vector<8x256xf32>
    %15 = arith.addf %13, %14 : vector<8x256xf32>
    %16 = arith.truncf %15 : vector<8x256xf32> to vector<8x256xbf16>
    %17 = arith.index_cast %c0_i32 : i32 to index
    %c0_11 = arith.constant 0 : index
    %c0_12 = arith.constant 0 : index
    %18 = vector.load %arg7[%17, %c0_11, %c0_12] : memref<2x8x256xbf16, #tpu.memory_space<vmem>>, vector<1x8x256xbf16>
    %19 = vector.shape_cast %18 : vector<1x8x256xbf16> to vector<8x256xbf16>
    %20 = vector.shape_cast %16 : vector<8x256xbf16> to vector<1x8x256xbf16>
    tpu.vector_store %arg7[%17, %c0_11, %c0_12], %20 {strides = array<i32>} : memref<2x8x256xbf16, #tpu.memory_space<vmem>>, vector<1x8x256xbf16>,
    %c1_i32 = arith.constant 1 : i32
    %21 = arith.index_cast %c1_i32 : i32 to index
    %c0_13 = arith.constant 0 : index
    %c0_14 = arith.constant 0 : index
    %22 = vector.load %arg2[%21, %c0_13, %c0_14] : memref<2x4x256xbf16, #tpu.memory_space<vmem>>, vector<1x4x256xbf16>
    %23 = vector.shape_cast %22 : vector<1x4x256xbf16> to vector<4x256xbf16>
    %cst_15 = arith.constant dense<0.000000e+00> : vector<32x256xf32>
    %24 = tpu.matmul %0, %23, %cst_15 {dimension_numbers = #tpu.dot_dimension_numbers<[1], [0], [0], [1], [0, 0, 1, 1], [], []>} : vector<32x4xbf16>, vector<4x256xbf16>, vector<32x256xf32> -> vector<32x256xf32>
    %25 = vector.broadcast %1 : vector<32x1xf32> to vector<32x256xf32>
    %26 = arith.addf %24, %25 : vector<32x256xf32>
    %cst_16 = arith.constant 0.000000e+00 : f32
    %27 = vector.broadcast %cst_16 : f32 to vector<32x256xf32>
    %28 = arith.maximumf %26, %27 : vector<32x256xf32>
    %29 = arith.truncf %28 : vector<32x256xf32> to vector<32x256xbf16>
    %cst_17 = arith.constant dense<0.000000e+00> : vector<8x256xf32>
    %30 = tpu.matmul %2, %29, %cst_17 {dimension_numbers = #tpu.dot_dimension_numbers<[1], [0], [0], [1], [0, 0, 1, 1], [], []>} : vector<8x32xbf16>, vector<32x256xbf16>, vector<8x256xf32> -> vector<8x256xf32>
    %31 = vector.broadcast %3 : vector<8x1xf32> to vector<8x256xf32>
    %32 = arith.addf %30, %31 : vector<8x256xf32>
    %33 = arith.truncf %32 : vector<8x256xf32> to vector<8x256xbf16>
    %34 = arith.index_cast %c1_i32 : i32 to index
    %c0_18 = arith.constant 0 : index
    %c0_19 = arith.constant 0 : index
    %35 = vector.load %arg7[%34, %c0_18, %c0_19] : memref<2x8x256xbf16, #tpu.memory_space<vmem>>, vector<1x8x256xbf16>
    %36 = vector.shape_cast %35 : vector<1x8x256xbf16> to vector<8x256xbf16>
    %37 = vector.shape_cast %33 : vector<8x256xbf16> to vector<1x8x256xbf16>
    tpu.vector_store %arg7[%34, %c0_18, %c0_19], %37 {strides = array<i32>} : memref<2x8x256xbf16, #tpu.memory_space<vmem>>, vector<1x8x256xbf16>,
    %c2_i32 = arith.constant 2 : i32
    return
  }
  func.func @transform_0(%arg0: i32, %arg1: i32) -> (i32, i32, i32) {
    %c0_i32 = arith.constant 0 : i32
    %c0_i32_0 = arith.constant 0 : i32
    return %arg0, %c0_i32, %arg1 : i32, i32, i32
  }
  func.func @transform_1(%arg0: i32, %arg1: i32) -> (i32, i32) {
    %c0_i32 = arith.constant 0 : i32
    %c0_i32_0 = arith.constant 0 : i32
    %c0_i32_1 = arith.constant 0 : i32
    return %c0_i32, %c0_i32_0 : i32, i32
  }
  func.func @transform_2(%arg0: i32, %arg1: i32) -> (i32, i32) {
    %c0_i32 = arith.constant 0 : i32
    %c0_i32_0 = arith.constant 0 : i32
    %c0_i32_1 = arith.constant 0 : i32
    return %c0_i32, %c0_i32_0 : i32, i32
  }
  func.func @transform_3(%arg0: i32, %arg1: i32) -> (i32, i32) {
    %c0_i32 = arith.constant 0 : i32
    %c0_i32_0 = arith.constant 0 : i32
    %c0_i32_1 = arith.constant 0 : i32
    return %c0_i32, %c0_i32_0 : i32, i32
  }
  func.func @transform_4(%arg0: i32, %arg1: i32) -> (i32, i32) {
    %c0_i32 = arith.constant 0 : i32
    %c0_i32_0 = arith.constant 0 : i32
    %c0_i32_1 = arith.constant 0 : i32
    return %c0_i32, %c0_i32_0 : i32, i32
  }
  func.func @transform_5(%arg0: i32, %arg1: i32) -> (i32, i32, i32) {
    %c0_i32 = arith.constant 0 : i32
    %c0_i32_0 = arith.constant 0 : i32
    return %arg0, %c0_i32, %arg1 : i32, i32, i32
  }
}

</mosaic_0001>

<llo_original>
// kernel: tpu_custom_call.1
$region0: #{tpu_custom_call.1}
  #allocation0 [shape = 'u32[]', space=smem, size = 0x4, offset = 0x4, fixed_abs, tag = 'smem constant byte address 0x4 - core index']
  #allocation1 [shape = 'u32[144,128]{1,0:T(1,128)}', space=vmem, size = 0x12000, scoped, tag = 'internal scratch']
  %s0 = inlined_call_operand.vmem [shape: bf16[2,4,256], index: 0, kind: input, shape index: {}]
  %s1 = inlined_call_operand.vmem [shape: bf16[32,4], index: 1, kind: input, shape index: {}]
  %s2 = inlined_call_operand.vmem [shape: f32[32,1], index: 2, kind: input, shape index: {}]
  %s3 = inlined_call_operand.vmem [shape: bf16[8,32], index: 3, kind: input, shape index: {}]
  %s4 = inlined_call_operand.vmem [shape: f32[8,1], index: 4, kind: input, shape index: {}]
  %s5 = inlined_call_operand.hbm [shape: bf16[2,8,256], index: 5, kind: output, shape index: {}]
  %s6 = sld [smem:[#allocation0]]
  $region30: #{tpu_custom_call.1} parent=0
    _
  %s8 = ssub.s32 1, %s6
  %s9 = scalar_select 0, %s8, %s6
  $region1: #{tpu_custom_call.1} parent=0
    #allocation2 [shape = 'u8[8192]{0}', space=vmem, size = 0x2000, scoped, tag = 'output window, operand 0, single buffered']
    #allocation3 [shape = 's32[1]{0}', space=sflag, size = 0x4, scoped, tag = 'scoped memory for tpu_custom_call.1']
    %10 = vsyncpa [#allocation3], 0
    // Predicated region
    $region2: #{tpu_custom_call.1} parent=1 // pred_check
      _
    $region3: #{tpu_custom_call.1} parent=1 // pred_check_branch
      %12 = sbr.rel (0) target = $region5
    $region4: #{tpu_custom_call.1} parent=1 // pred_region
      _
    $region5: #{tpu_custom_call.1} parent=1 // pred_fallthru
      _
    // Predicated region
    $region6: #{tpu_custom_call.1} parent=1 // pred_check
      _
    $region7: #{tpu_custom_call.1} parent=1 // pred_check_branch
      %14 = sbr.rel (0) target = $region9
    $region8: #{tpu_custom_call.1} parent=1 // pred_region
      _
    $region9: #{tpu_custom_call.1} parent=1 // pred_fallthru
      _
    // Predicated region
    $region10: #{tpu_custom_call.1} parent=1 // pred_check
      _
    $region11: #{tpu_custom_call.1} parent=1 // pred_check_branch
      %16 = sbr.rel (0) target = $region13
    $region12: #{tpu_custom_call.1} parent=1 // pred_region
      _
    $region13: #{tpu_custom_call.1} parent=1 // pred_fallthru
      _
    // Predicated region
    $region14: #{tpu_custom_call.1} parent=1 // pred_check
      _
    $region15: #{tpu_custom_call.1} parent=1 // pred_check_branch
      %18 = sbr.rel (0) target = $region17
    $region16: #{tpu_custom_call.1} parent=1 // pred_region
      _
    $region17: #{tpu_custom_call.1} parent=1 // pred_fallthru
      _
    // Predicated region
    $region18: #{tpu_custom_call.1} parent=1 // pred_check
      _
    $region19: #{tpu_custom_call.1} parent=1 // pred_check_branch
      %20 = sbr.rel (0) target = $region21
    $region20: #{tpu_custom_call.1} parent=1 // pred_region
      _
    $region21: #{tpu_custom_call.1} parent=1 // pred_fallthru
      _
    %v22 = vld [vmem:[%s1] sm:$0xf]
    %v23 = vld [vmem:[%s1 + $0x4] sm:$0xf]
    %v24 = vld [vmem:[%s1 + $0x8] sm:$0xf]
    %v25 = vld [vmem:[%s1 + $0xc] sm:$0xf]
    %v26 = vld [vmem:[%s2] sm:$0xff]
    %v27 = vld [vmem:[%s2 + $0x8] sm:$0xff]
    %v28 = vld [vmem:[%s2 + $0x10] sm:$0xff]
    %v29 = vld [vmem:[%s2 + $0x18] sm:$0xff]
    %v30 = vld [vmem:[%s3] sm:$0xf]
    %v31 = vld [vmem:[%s4] sm:$0xff]
    %v32 = vld [vmem:[%s0] sm:$0xf]
    %34 = vset.pattern.permute.xlu0 0
    %35 = vperm.xlu0 %34, %v26
    %v36 = vpop.permute.xlu0 %35
    %39 = vset.pattern.permute.xlu0 0
    %40 = vperm.xlu0 %39, %v27
    %v41 = vpop.permute.xlu0 %40
    %44 = vset.pattern.permute.xlu0 0
    %45 = vperm.xlu0 %44, %v28
    %v46 = vpop.permute.xlu0 %45
    %49 = vset.pattern.permute.xlu0 0
    %50 = vperm.xlu0 %49, %v29
    %v51 = vpop.permute.xlu0 %50
    %v57 = vunpack.c.l.b16 %v22
    %v58 = vunpack.c.l.b16 %v23
    %v59 = vunpack.c.l.b16 %v24
    %v60 = vunpack.c.l.b16 %v25
    %v61 = vpack.c.b16 %v58, %v57
    %v62 = vpack.c.b16 %v60, %v59
    %v65 = vunpack.c.l.s4 1983009808
    %v66 = vunpack.c.0.s8 %v65
    %v67 = vlaneseq
    %v68 = vshrl.u32 %v67, 7
    %v69 = vsub.s32 %v66, %v68
    %v70 = vrot.slane %v32, %v69
    %v71 = vcombine.high %v70, %v70
    %vm72 = vcmask 31744
    %v74 = vsel %vm72, %v61, 0
    %v77 = vsel %vm72, %v62, 0
    %vm79 = vcmask 1041408
    %v81 = vsel %vm79, %v70, 0
    %v84 = vsel %vm79, %v71, 0
    %86 = vmatprep.subr.bf16.mxu0 %v84
    %87 = vmatpush1.bf16.msra.mxu0 %v81
    %88 = vmatprep.subr.bf16.mxu0 0
    %89 = vmatpush1.bf16.msra.mxu0 0
    %90 = vmatprep.subr.bf16.mxu0 0
    %91 = vmatpush1.bf16.msra.mxu0 0
    %92 = vmatprep.subr.bf16.mxu0 0
    %93 = vmatpush1.bf16.msra.mxu0 0
    %94 = vmatprep.subr.bf16.mxu0 0
    %95 = vmatpush1.bf16.msra.mxu0 0
    %96 = vmatprep.subr.bf16.mxu0 0
    %97 = vmatpush1.bf16.msra.mxu0 0
    %98 = vmatprep.subr.bf16.mxu0 0
    %99 = vmatpush1.bf16.msra.mxu0 0
    %100 = vmatprep.subr.bf16.mxu0 0
    %101 = vmatpush1.bf16.msra.mxu0 0
    %102 = vmatprep.subr.bf16.mxu0 0
    %103 = vmatpush1.bf16.msra.mxu0 0
    %104 = vmatprep.subr.bf16.mxu0 0
    %105 = vmatpush1.bf16.msra.mxu0 0
    %106 = vmatprep.subr.bf16.mxu0 0
    %107 = vmatpush1.bf16.msra.mxu0 0
    %108 = vmatprep.subr.bf16.mxu0 0
    %109 = vmatpush1.bf16.msra.mxu0 0
    %110 = vmatprep.subr.bf16.mxu0 0
    %111 = vmatpush1.bf16.msra.mxu0 0
    %112 = vmatprep.subr.bf16.mxu0 0
    %113 = vmatpush1.bf16.msra.mxu0 0
    %114 = vmatprep.subr.bf16.mxu0 0
    %115 = vmatpush1.bf16.msra.mxu0 0
    %116 = vmatprep.subr.bf16.mxu0 0
    %117 = vmatpush1.bf16.msra.mxu0 0
    %118 = vmatprep.mubr.bf16.mxu0 0
    %119 = vmatmul.mubr.bf16.gmra.mrb[0].mxu0 %v74
    %v120 = vpop.f32.mrb[0].mxu0
    %v121 = vadd.f32 %v36, %v120
    %v122 = vpop.f32.mrb[0].mxu0
    %v123 = vadd.f32 %v36, %v122
    %v124 = vpop.f32.mrb[0].mxu0
    %v125 = vadd.f32 %v41, %v124
    %v126 = vpop.f32.mrb[0].mxu0
    %v127 = vadd.f32 %v41, %v126
    %128 = vmatprep.mubr.bf16.mxu0 0
    %129 = vmatmul.mubr.bf16.gmra.mrb[0].mxu0 %v77
    %v130 = vpop.f32.mrb[0].mxu0
    %v131 = vadd.f32 %v46, %v130
    %v132 = vpop.f32.mrb[0].mxu0
    %v133 = vadd.f32 %v46, %v132
    %v134 = vpop.f32.mrb[0].mxu0
    %v135 = vadd.f32 %v51, %v134
    %v136 = vpop.f32.mrb[0].mxu0
    %v137 = vadd.f32 %v51, %v136
    %138 = vdwg.mxu0
    %v139 = vmax.f32 %v121, 0.0
    %v140 = vmax.f32 %v123, 0.0
    %v141 = vmax.f32 %v125, 0.0
    %v142 = vmax.f32 %v127, 0.0
    %v143 = vmax.f32 %v131, 0.0
    %v144 = vmax.f32 %v133, 0.0
    %v145 = vmax.f32 %v135, 0.0
    %v146 = vmax.f32 %v137, 0.0
    %v147 = vpack.c.bf16 %v141, %v139
    %v148 = vpack.c.bf16 %v142, %v140
    %v149 = vpack.c.bf16 %v145, %v143
    %v150 = vpack.c.bf16 %v146, %v144
    %152 = vset.pattern.permute.xlu0 0
    %153 = vperm.xlu0 %152, %v31
    %v154 = vpop.permute.xlu0 %153
    %vm156 = vcmask 261120
    %v158 = vsel %vm156, %v30, 0
    %160 = vmatprep.subr.bf16.mxu0 %v148
    %161 = vmatpush1.bf16.msra.mxu0 %v147
    %162 = vmatprep.subr.bf16.mxu0 %v150
    %163 = vmatpush1.bf16.msra.mxu0 %v149
    %164 = vmatprep.subr.bf16.mxu0 0
    %165 = vmatpush1.bf16.msra.mxu0 0
    %166 = vmatprep.subr.bf16.mxu0 0
    %167 = vmatpush1.bf16.msra.mxu0 0
    %168 = vmatprep.subr.bf16.mxu0 0
    %169 = vmatpush1.bf16.msra.mxu0 0
    %170 = vmatprep.subr.bf16.mxu0 0
    %171 = vmatpush1.bf16.msra.mxu0 0
    %172 = vmatprep.subr.bf16.mxu0 0
    %173 = vmatpush1.bf16.msra.mxu0 0
    %174 = vmatprep.subr.bf16.mxu0 0
    %175 = vmatpush1.bf16.msra.mxu0 0
    %176 = vmatprep.subr.bf16.mxu0 0
    %177 = vmatpush1.bf16.msra.mxu0 0
    %178 = vmatprep.subr.bf16.mxu0 0
    %179 = vmatpush1.bf16.msra.mxu0 0
    %180 = vmatprep.subr.bf16.mxu0 0
    %181 = vmatpush1.bf16.msra.mxu0 0
    %182 = vmatprep.subr.bf16.mxu0 0
    %183 = vmatpush1.bf16.msra.mxu0 0
    %184 = vmatprep.subr.bf16.mxu0 0
    %185 = vmatpush1.bf16.msra.mxu0 0
    %186 = vmatprep.subr.bf16.mxu0 0
    %187 = vmatpush1.bf16.msra.mxu0 0
    %188 = vmatprep.subr.bf16.mxu0 0
    %189 = vmatpush1.bf16.msra.mxu0 0
    %190 = vmatprep.subr.bf16.mxu0 0
    %191 = vmatpush1.bf16.msra.mxu0 0
    %192 = vmatprep.mubr.bf16.mxu0 0
    %193 = vmatmul.mubr.bf16.gmra.mrb[0].mxu0 %v158
    %v194 = vpop.f32.mrb[0].mxu0
    %v195 = vadd.f32 %v154, %v194
    %v196 = vpop.f32.mrb[0].mxu0
    %v197 = vadd.f32 %v154, %v196
    %v198 = vpop.f32.mrb[0].mxu0
    %v199 = vpop.f32.mrb[0].mxu0
    %200 = vdwg.mxu0
    %v201 = vpack.c.bf16 %v195, %v195
    %v202 = vpack.c.bf16 %v197, %v197
    %v205 = vunpack.c.l.b16 %v201
    %v206 = vunpack.c.l.b16 %v202
    %v207 = vpack.c.b16 %v206, %v205
    %209 = vst [vmem:[#allocation2] sm:$0xff] %v207
    %s210 = scalar_lea.vmem %s0, 4
    %v211 = vld [vmem:[%s210] sm:$0xf]
    %v214 = vunpack.c.l.s4 1983009808
    %v215 = vunpack.c.0.s8 %v214
    %v216 = vlaneseq
    %v217 = vshrl.u32 %v216, 7
    %v218 = vsub.s32 %v215, %v217
    %v219 = vrot.slane %v211, %v218
    %v220 = vcombine.high %v219, %v219
    %v222 = vsel %vm79, %v219, 0
    %v225 = vsel %vm79, %v220, 0
    %227 = vmatprep.subr.bf16.mxu0 %v225
    %228 = vmatpush1.bf16.msra.mxu0 %v222
    %229 = vmatprep.subr.bf16.mxu0 0
    %230 = vmatpush1.bf16.msra.mxu0 0
    %231 = vmatprep.subr.bf16.mxu0 0
    %232 = vmatpush1.bf16.msra.mxu0 0
    %233 = vmatprep.subr.bf16.mxu0 0
    %234 = vmatpush1.bf16.msra.mxu0 0
    %235 = vmatprep.subr.bf16.mxu0 0
    %236 = vmatpush1.bf16.msra.mxu0 0
    %237 = vmatprep.subr.bf16.mxu0 0
    %238 = vmatpush1.bf16.msra.mxu0 0
    %239 = vmatprep.subr.bf16.mxu0 0
    %240 = vmatpush1.bf16.msra.mxu0 0
    %241 = vmatprep.subr.bf16.mxu0 0
    %242 = vmatpush1.bf16.msra.mxu0 0
    %243 = vmatprep.subr.bf16.mxu0 0
    %244 = vmatpush1.bf16.msra.mxu0 0
    %245 = vmatprep.subr.bf16.mxu0 0
    %246 = vmatpush1.bf16.msra.mxu0 0
    %247 = vmatprep.subr.bf16.mxu0 0
    %248 = vmatpush1.bf16.msra.mxu0 0
    %249 = vmatprep.subr.bf16.mxu0 0
    %250 = vmatpush1.bf16.msra.mxu0 0
    %251 = vmatprep.subr.bf16.mxu0 0
    %252 = vmatpush1.bf16.msra.mxu0 0
    %253 = vmatprep.subr.bf16.mxu0 0
    %254 = vmatpush1.bf16.msra.mxu0 0
    %255 = vmatprep.subr.bf16.mxu0 0
    %256 = vmatpush1.bf16.msra.mxu0 0
    %257 = vmatprep.subr.bf16.mxu0 0
    %258 = vmatpush1.bf16.msra.mxu0 0
    %259 = vmatprep.mubr.bf16.mxu0 0
    %260 = vmatmul.mubr.bf16.gmra.mrb[0].mxu0 %v74
    %v261 = vpop.f32.mrb[0].mxu0
    %v262 = vadd.f32 %v36, %v261
    %v263 = vpop.f32.mrb[0].mxu0
    %v264 = vadd.f32 %v36, %v263
    %v265 = vpop.f32.mrb[0].mxu0
    %v266 = vadd.f32 %v41, %v265
    %v267 = vpop.f32.mrb[0].mxu0
    %v268 = vadd.f32 %v41, %v267
    %269 = vmatprep.mubr.bf16.mxu0 0
    %270 = vmatmul.mubr.bf16.gmra.mrb[0].mxu0 %v77
    %v271 = vpop.f32.mrb[0].mxu0
    %v272 = vadd.f32 %v46, %v271
    %v273 = vpop.f32.mrb[0].mxu0
    %v274 = vadd.f32 %v46, %v273
    %v275 = vpop.f32.mrb[0].mxu0
    %v276 = vadd.f32 %v51, %v275
    %v277 = vpop.f32.mrb[0].mxu0
    %v278 = vadd.f32 %v51, %v277
    %279 = vdwg.mxu0
    %v280 = vmax.f32 %v262, 0.0
    %v281 = vmax.f32 %v264, 0.0
    %v282 = vmax.f32 %v266, 0.0
    %v283 = vmax.f32 %v268, 0.0
    %v284 = vmax.f32 %v272, 0.0
    %v285 = vmax.f32 %v274, 0.0
    %v286 = vmax.f32 %v276, 0.0
    %v287 = vmax.f32 %v278, 0.0
    %v288 = vpack.c.bf16 %v282, %v280
    %v289 = vpack.c.bf16 %v283, %v281
    %v290 = vpack.c.bf16 %v286, %v284
    %v291 = vpack.c.bf16 %v287, %v285
    %292 = vmatprep.subr.bf16.mxu0 %v289
    %293 = vmatpush1.bf16.msra.mxu0 %v288
    %294 = vmatprep.subr.bf16.mxu0 %v291
    %295 = vmatpush1.bf16.msra.mxu0 %v290
    %296 = vmatprep.subr.bf16.mxu0 0
    %297 = vmatpush1.bf16.msra.mxu0 0
    %298 = vmatprep.subr.bf16.mxu0 0
    %299 = vmatpush1.bf16.msra.mxu0 0
    %300 = vmatprep.subr.bf16.mxu0 0
    %301 = vmatpush1.bf16.msra.mxu0 0
    %302 = vmatprep.subr.bf16.mxu0 0
    %303 = vmatpush1.bf16.msra.mxu0 0
    %304 = vmatprep.subr.bf16.mxu0 0
    %305 = vmatpush1.bf16.msra.mxu0 0
    %306 = vmatprep.subr.bf16.mxu0 0
    %307 = vmatpush1.bf16.msra.mxu0 0
    %308 = vmatprep.subr.bf16.mxu0 0
    %309 = vmatpush1.bf16.msra.mxu0 0
    %310 = vmatprep.subr.bf16.mxu0 0
    %311 = vmatpush1.bf16.msra.mxu0 0
    %312 = vmatprep.subr.bf16.mxu0 0
    %313 = vmatpush1.bf16.msra.mxu0 0
    %314 = vmatprep.subr.bf16.mxu0 0
    %315 = vmatpush1.bf16.msra.mxu0 0
    %316 = vmatprep.subr.bf16.mxu0 0
    %317 = vmatpush1.bf16.msra.mxu0 0
    %318 = vmatprep.subr.bf16.mxu0 0
    %319 = vmatpush1.bf16.msra.mxu0 0
    %320 = vmatprep.subr.bf16.mxu0 0
    %321 = vmatpush1.bf16.msra.mxu0 0
    %322 = vmatprep.subr.bf16.mxu0 0
    %323 = vmatpush1.bf16.msra.mxu0 0
    %324 = vmatprep.mubr.bf16.mxu0 0
    %325 = vmatmul.mubr.bf16.gmra.mrb[0].mxu0 %v158
    %v326 = vpop.f32.mrb[0].mxu0
    %v327 = vadd.f32 %v154, %v326
    %v328 = vpop.f32.mrb[0].mxu0
    %v329 = vadd.f32 %v154, %v328
    %v330 = vpop.f32.mrb[0].mxu0
    %v331 = vpop.f32.mrb[0].mxu0
    %332 = vdwg.mxu0
    %v333 = vpack.c.bf16 %v327, %v327
    %v334 = vpack.c.bf16 %v329, %v329
    %v337 = vunpack.c.l.b16 %v333
    %v338 = vunpack.c.l.b16 %v334
    %v339 = vpack.c.b16 %v338, %v337
    %s341 = scalar_lea.vmem [#allocation2], 8
    %342 = vst [vmem:[%s341] sm:$0xff] %v339
    // Predicated region
    $region22: #{tpu_custom_call.1} parent=1 // pred_check
      _
    $region23: #{tpu_custom_call.1} parent=1 // pred_check_branch
      %344 = sbr.rel (0) target = $region25
    $region24: #{tpu_custom_call.1} parent=1 // pred_region
      %s346 = ssub.s32 256, 256
      %347 = vsyncadd [#allocation3], %s346
      %s348 = sshll.u32 [#allocation2], 4
      %s349 = int_to_ptr.vmem [resolvable:$true] %s348
      %354 = dma.vmem_to_hbm [thread:$0]  %s349, 256, %s5, [#allocation3], 128, 128, 8
    $region25: #{tpu_custom_call.1} parent=1 // pred_fallthru
      _
    // Predicated region
    $region26: #{tpu_custom_call.1} parent=1 // pred_check
      _
    $region27: #{tpu_custom_call.1} parent=1 // pred_check_branch
      %356 = sbr.rel (0) target = $region29
    $region28: #{tpu_custom_call.1} parent=1 // pred_region
      %357 = dma.done [#allocation3], 256
    $region29: #{tpu_custom_call.1} parent=1 // pred_fallthru
      _
    %358 = vsyncpa [#allocation3], 1

</llo_original>
